<compile_context>
chip_gen: v5e
topology: v5e:2x2
jax: 0.10.0
libtpu: 0.0.40
codegen_flags: <defaults>
</compile_context>

<pallas_src>
import functools

import jax
import jax.numpy as jnp
import numpy as np
from jax.experimental import pallas as pl
from jax.experimental.pallas import tpu as pltpu  # noqa: F401  (TPU backend)


def _conv_act_reg_kernel(x_ref, w_ref, y_ref, reg_ref, *, reg_strength):
    """Whole problem in one invocation (no grid).

    x_ref  : (N*Ho, Wo*K_pad)    im2col'd, bias-augmented input rows   (VMEM)
    w_ref  : (Wo*K_pad, Wo*Cout) block-diagonal (weight|bias|0) matrix (VMEM)
    y_ref  : (N*Ho, Wo*Cout)     sigmoid(conv(x) + bias), lane-dense   (VMEM)
    reg_ref: (1, 1)              reg_strength * sum(square(activation))
    """
    # Single MXU push: conv + bias in one matmul (bias rides on the 1-column),
    # f32 accumulation regardless of operand dtype.
    acc = jnp.dot(x_ref[...], w_ref[...], preferred_element_type=jnp.float32)
    y = jax.nn.sigmoid(acc)                       # EUP, f32 (mandatory on v5e)
    y_ref[...] = y.astype(y_ref.dtype)            # full-width unmasked store
    # L2Reg hot path folded in-kernel, including the reg_strength scale.
    reg_ref[...] = (reg_strength * jnp.sum(y * y)).reshape(1, 1)


def _pack_weight(weight_oihw, bias, Wo, k_pad):
    """Build the block-diagonal (Wo*k_pad, Wo*Cout) matmul weight ONCE."""
    Cout, Cin, KH, KW = weight_oihw.shape
    K = KH * KW * Cin
    # (kh, kw, ci) flatten order -- must match the im2col patch order below.
    w_flat = jnp.transpose(weight_oihw, (2, 3, 1, 0)).reshape(K, Cout)   # (36, 8)
    w_aug = jnp.concatenate(
        [w_flat, bias.reshape(1, Cout),
         jnp.zeros((k_pad - K - 1, Cout), w_flat.dtype)], axis=0)        # (40, 8)
    eye = jnp.eye(Wo, dtype=w_aug.dtype)
    # Block-diagonal replication over the Wo output positions so one matmul
    # emits the lane-dense (N*Ho, Wo*Cout) output slab directly.
    w_bd = jnp.einsum("ij,kc->ikjc", eye, w_aug).reshape(
        Wo * k_pad, Wo * Cout)                                           # (640, 128)
    return w_bd


@functools.partial(
    jax.jit,
    static_argnames=("padding", "KH", "KW", "Cout", "reg_strength", "k_pad",
                     "operand_dtype"))
def _forward(x_nchw, w_bd, *, padding, KH, KW, Cout, reg_strength, k_pad,
             operand_dtype):
    """Jitted forward: im2col glue + single-shot pallas_call + NCHW repack."""
    N, Cin, H, W = x_nchw.shape
    Ho = H + 2 * padding - KH + 1
    Wo = W + 2 * padding - KW + 1
    K = KH * KW * Cin

    # ---- glue (fused by jit): im2col with bias column + zero pad to k_pad ----
    x_nhwc = jnp.transpose(x_nchw, (0, 2, 3, 1))                          # (N,H,W,Cin)
    x_pad = jnp.pad(
        x_nhwc, ((0, 0), (padding, padding), (padding, padding), (0, 0)))
    pieces = [x_pad[:, kh:kh + Ho, kw:kw + Wo, :]
              for kh in range(KH) for kw in range(KW)]                    # (kh,kw,ci)
    pieces.append(jnp.ones((N, Ho, Wo, 1), x_pad.dtype))                  # bias col
    if k_pad > K + 1:
        pieces.append(jnp.zeros((N, Ho, Wo, k_pad - K - 1), x_pad.dtype))
    patches = jnp.concatenate(pieces, axis=-1)                            # (N,Ho,Wo,k_pad)
    x_rows = patches.reshape(N * Ho, Wo * k_pad).astype(operand_dtype)    # (32, 640)

    y2d, reg = pl.pallas_call(
        functools.partial(_conv_act_reg_kernel, reg_strength=reg_strength),
        out_shape=(
            jax.ShapeDtypeStruct((N * Ho, Wo * Cout), x_nchw.dtype),
            jax.ShapeDtypeStruct((1, 1), jnp.float32),
        ),
        # No grid / BlockSpecs: whole arrays resident in VMEM (<0.5 MiB on
        # v5e/v6e/v7x), single invocation -> no per-step pipeline overhead.
    )(x_rows, w_bd.astype(operand_dtype))

    # glue: back to PyTorch NCHW (neutral under jit)
    y_nchw = jnp.transpose(y2d.reshape(N, Ho, Wo, Cout), (0, 3, 1, 2))
    return y_nchw, reg[0, 0]


class Conv2dActReg:
    """Eval-mode forward of the PyTorch Conv2dActReg (sigmoid + L2 reg)."""

    def __init__(self, weight_oihw, bias, *, padding=1, reg_strength=0.01,
                 operand_dtype=jnp.float32):
        self.padding = int(padding)
        self.reg_strength = float(reg_strength)
        self.operand_dtype = operand_dtype
        self.weight = weight_oihw
        self.bias = bias
        Cout, Cin, KH, KW = weight_oihw.shape
        self.Cout, self.Cin, self.KH, self.KW = Cout, Cin, KH, KW
        K = KH * KW * Cin
        # Per-output-position block padded to a sublane-aligned width; with
        # Wo=16 this gives Wo*k_pad = 640 (multiple of 128 lanes).
        self.k_pad = ((K + 1 + 7) // 8) * 8
        self._wbd_cache = {}   # packed weight depends only on Wo -> build once

    def _get_w_bd(self, Wo):
        if Wo not in self._wbd_cache:
            self._wbd_cache[Wo] = jax.block_until_ready(
                _pack_weight(self.weight, self.bias, Wo, self.k_pad))
        return self._wbd_cache[Wo]

    def __call__(self, x_nchw):
        Wo = x_nchw.shape[3] + 2 * self.padding - self.KW + 1
        w_bd = self._get_w_bd(Wo)
        return _forward(
            x_nchw, w_bd,
            padding=self.padding, KH=self.KH, KW=self.KW, Cout=self.Cout,
            reg_strength=self.reg_strength, k_pad=self.k_pad,
            operand_dtype=self.operand_dtype)


def _reference(x_nchw, weight_oihw, bias, *, padding=1, reg_strength=0.01):
    y = jax.lax.conv_general_dilated(
        x_nchw, weight_oihw,
        window_strides=(1, 1),
        padding=[(padding, padding), (padding, padding)],
        dimension_numbers=("NCHW", "OIHW", "NCHW"),
    )
    y = y + bias[None, :, None, None]
    y = jax.nn.sigmoid(y)
    return y, reg_strength * jnp.sum(jnp.square(y))


if __name__ == "__main__":
    key = jax.random.PRNGKey(0)
    kx, kw, kb = jax.random.split(key, 3)

    N, Cin, H, W = 2, 4, 16, 16
    Cout, KH, KW = 8, 3, 3
    padding = 1
    reg_strength = 0.01

    x = jax.random.normal(kx, (N, Cin, H, W), dtype=jnp.float32)
    fan_in = Cin * KH * KW
    weight = jax.random.normal(kw, (Cout, Cin, KH, KW), dtype=jnp.float32) / jnp.sqrt(fan_in)
    bias = jax.random.normal(kb, (Cout,), dtype=jnp.float32) * 0.1

    layer = Conv2dActReg(weight, bias, padding=padding, reg_strength=reg_strength)
    y, reg = layer(x)
    y = jax.block_until_ready(y)
    reg = jax.block_until_ready(reg)

    y_ref, reg_ref = _reference(x, weight, bias, padding=padding, reg_strength=reg_strength)
    assert np.allclose(np.asarray(y), np.asarray(y_ref), rtol=1e-4, atol=1e-5)
    assert np.allclose(float(reg), float(reg_ref), rtol=1e-4, atol=1e-5)

    print("KERNEL_OK")
</pallas_src>

<mosaic_0001>
module attributes {stable_mosaic.version = 11 : i64} {
  func.func @_conv_act_reg_kernel(%arg0: memref<32x640xf32, #tpu.memory_space<vmem>>, %arg1: memref<640x128xf32, #tpu.memory_space<vmem>>, %arg2: memref<32x128xf32, #tpu.memory_space<vmem>>, %arg3: memref<1x1xf32, #tpu.memory_space<vmem>>) attributes {dimension_semantics = [], scalar_prefetch = 0 : i64, scratch_operands = 0 : i64, tpu.core_type = #tpu.core_type<tc>} {
    %c0 = arith.constant 0 : index
    %c0_0 = arith.constant 0 : index
    %0 = vector.load %arg0[%c0, %c0_0] : memref<32x640xf32, #tpu.memory_space<vmem>>, vector<32x640xf32>
    %c0_1 = arith.constant 0 : index
    %c0_2 = arith.constant 0 : index
    %1 = vector.load %arg1[%c0_1, %c0_2] : memref<640x128xf32, #tpu.memory_space<vmem>>, vector<640x128xf32>
    %cst = arith.constant dense<0.000000e+00> : vector<32x128xf32>
    %2 = tpu.matmul %0, %1, %cst {dimension_numbers = #tpu.dot_dimension_numbers<[1], [0], [0], [1], [0, 0, 1, 1], [], []>} : vector<32x640xf32>, vector<640x128xf32>, vector<32x128xf32> -> vector<32x128xf32>
    %3 = arith.negf %2 : vector<32x128xf32>
    %4 = math.exp %3 : vector<32x128xf32>
    %cst_3 = arith.constant 1.000000e+00 : f32
    %5 = vector.broadcast %cst_3 : f32 to vector<32x128xf32>
    %6 = arith.addf %5, %4 : vector<32x128xf32>
    %7 = arith.divf %5, %6 : vector<32x128xf32>
    %c0_4 = arith.constant 0 : index
    %c0_5 = arith.constant 0 : index
    %8 = vector.load %arg2[%c0_4, %c0_5] : memref<32x128xf32, #tpu.memory_space<vmem>>, vector<32x128xf32>
    tpu.vector_store %arg2[%c0_4, %c0_5], %7 {strides = array<i32>} : memref<32x128xf32, #tpu.memory_space<vmem>>, vector<32x128xf32>,
    %9 = arith.mulf %7, %7 : vector<32x128xf32>
    %10 = vector.shape_cast %9 : vector<32x128xf32> to vector<1x32x128xf32>
    %cst_6 = arith.constant dense<0.000000e+00> : vector<1xf32>
    %11 = vector.multi_reduction <add>, %10, %cst_6 [1, 2] : vector<1x32x128xf32> to vector<1xf32>
    %12 = vector.shape_cast %11 : vector<1xf32> to vector<1x1x1xf32>
    %13 = vector.extract %12[0, 0, 0] : f32 from vector<1x1x1xf32>
    %cst_7 = arith.constant 0.00999999977 : f32
    %14 = arith.mulf %cst_7, %13 : f32
    %15 = vector.broadcast %14 : f32 to vector<1x1xf32>
    %c0_8 = arith.constant 0 : index
    %c0_9 = arith.constant 0 : index
    %16 = vector.load %arg3[%c0_8, %c0_9] : memref<1x1xf32, #tpu.memory_space<vmem>>, vector<1x1xf32>
    tpu.vector_store %arg3[%c0_8, %c0_9], %15 {strides = array<i32>} : memref<1x1xf32, #tpu.memory_space<vmem>>, vector<1x1xf32>,
    return
  }
}

</mosaic_0001>

<llo_original>
// kernel: _forward.1
$region0: #{_forward.1}
  #allocation0 [shape = 'u32[]', space=smem, size = 0x4, offset = 0x4, fixed_abs, tag = 'smem constant byte address 0x4 - core index']
  #allocation1 [shape = 'u32[72,128]{1,0:T(1,128)}', space=vmem, size = 0x9000, scoped, tag = 'internal scratch']
  %s0 = inlined_call_operand.vmem [shape: f32[32,640], index: 0, kind: input, shape index: {}]
  %s1 = inlined_call_operand.vmem [shape: f32[640,128], index: 1, kind: input, shape index: {}]
  %s2 = inlined_call_operand.vmem [shape: f32[32,128], index: 2, kind: output, shape index: {0}]
  %s3 = inlined_call_operand.hbm [shape: f32[1,1], index: 3, kind: output, shape index: {1}]
  %4 = xla_tuple %s2, %s3
  %s5 = sld [smem:[#allocation0]]
  $region26: #{_forward.1} parent=0
    _
  %s7 = ssub.s32 1, %s5
  %s8 = scalar_select 0, %s7, %s5
  $region1: #{_forward.1} parent=0
    #allocation2 [shape = 'u8[512]{0}', space=vmem, size = 0x400, scoped, tag = 'output window, operand 1, single buffered']
    #allocation3 [shape = 's32[1]{0}', space=sflag, size = 0x4, scoped, tag = 'scoped memory for _forward.1']
    %9 = vsyncpa [#allocation3], 0
    // Predicated region
    $region2: #{_forward.1} parent=1 // pred_check
      _
    $region3: #{_forward.1} parent=1 // pred_check_branch
      %11 = sbr.rel (0) target = $region5
    $region4: #{_forward.1} parent=1 // pred_region
      _
    $region5: #{_forward.1} parent=1 // pred_fallthru
      _
    // Predicated region
    $region6: #{_forward.1} parent=1 // pred_check
      _
    $region7: #{_forward.1} parent=1 // pred_check_branch
      %13 = sbr.rel (0) target = $region9
    $region8: #{_forward.1} parent=1 // pred_region
      _
    $region9: #{_forward.1} parent=1 // pred_fallthru
      _
    %v14 = vld [vmem:[%s0] sm:$0xff]
    %v15 = vld [vmem:[%s0 + $0x8] sm:$0xff]
    %v16 = vld [vmem:[%s0 + $0x10] sm:$0xff]
    %v17 = vld [vmem:[%s0 + $0x18] sm:$0xff]
    %v18 = vld [vmem:[%s0 + $0x20] sm:$0xff]
    %v19 = vld [vmem:[%s0 + $0x28] sm:$0xff]
    %v20 = vld [vmem:[%s0 + $0x30] sm:$0xff]
    %v21 = vld [vmem:[%s0 + $0x38] sm:$0xff]
    %v22 = vld [vmem:[%s0 + $0x40] sm:$0xff]
    %v23 = vld [vmem:[%s0 + $0x48] sm:$0xff]
    %v24 = vld [vmem:[%s0 + $0x50] sm:$0xff]
    %v25 = vld [vmem:[%s0 + $0x58] sm:$0xff]
    %v26 = vld [vmem:[%s0 + $0x60] sm:$0xff]
    %v27 = vld [vmem:[%s0 + $0x68] sm:$0xff]
    %v28 = vld [vmem:[%s0 + $0x70] sm:$0xff]
    %v29 = vld [vmem:[%s0 + $0x78] sm:$0xff]
    %v30 = vld [vmem:[%s0 + $0x80] sm:$0xff]
    %v31 = vld [vmem:[%s0 + $0x88] sm:$0xff]
    %v32 = vld [vmem:[%s0 + $0x90] sm:$0xff]
    %v33 = vld [vmem:[%s0 + $0x98] sm:$0xff]
    %v34 = vld [vmem:[%s1] sm:$0xff]
    %v35 = vld [vmem:[%s1 + $0x8] sm:$0xff]
    %v36 = vld [vmem:[%s1 + $0x10] sm:$0xff]
    %v37 = vld [vmem:[%s1 + $0x18] sm:$0xff]
    %v38 = vld [vmem:[%s1 + $0x20] sm:$0xff]
    %v39 = vld [vmem:[%s1 + $0x28] sm:$0xff]
    %v40 = vld [vmem:[%s1 + $0x30] sm:$0xff]
    %v41 = vld [vmem:[%s1 + $0x38] sm:$0xff]
    %v42 = vld [vmem:[%s1 + $0x40] sm:$0xff]
    %v43 = vld [vmem:[%s1 + $0x48] sm:$0xff]
    %v44 = vld [vmem:[%s1 + $0x50] sm:$0xff]
    %v45 = vld [vmem:[%s1 + $0x58] sm:$0xff]
    %v46 = vld [vmem:[%s1 + $0x60] sm:$0xff]
    %v47 = vld [vmem:[%s1 + $0x68] sm:$0xff]
    %v48 = vld [vmem:[%s1 + $0x70] sm:$0xff]
    %v49 = vld [vmem:[%s1 + $0x78] sm:$0xff]
    %v50 = vld [vmem:[%s1 + $0x80] sm:$0xff]
    %v51 = vld [vmem:[%s1 + $0x88] sm:$0xff]
    %v52 = vld [vmem:[%s1 + $0x90] sm:$0xff]
    %v53 = vld [vmem:[%s1 + $0x98] sm:$0xff]
    %v54 = vld [vmem:[%s1 + $0xa0] sm:$0xff]
    %v55 = vld [vmem:[%s1 + $0xa8] sm:$0xff]
    %v56 = vld [vmem:[%s1 + $0xb0] sm:$0xff]
    %v57 = vld [vmem:[%s1 + $0xb8] sm:$0xff]
    %v58 = vld [vmem:[%s1 + $0xc0] sm:$0xff]
    %v59 = vld [vmem:[%s1 + $0xc8] sm:$0xff]
    %v60 = vld [vmem:[%s1 + $0xd0] sm:$0xff]
    %v61 = vld [vmem:[%s1 + $0xd8] sm:$0xff]
    %v62 = vld [vmem:[%s1 + $0xe0] sm:$0xff]
    %v63 = vld [vmem:[%s1 + $0xe8] sm:$0xff]
    %v64 = vld [vmem:[%s1 + $0xf0] sm:$0xff]
    %v65 = vld [vmem:[%s1 + $0xf8] sm:$0xff]
    %v66 = vld [vmem:[%s1 + $0x100] sm:$0xff]
    %v67 = vld [vmem:[%s1 + $0x108] sm:$0xff]
    %v68 = vld [vmem:[%s1 + $0x110] sm:$0xff]
    %v69 = vld [vmem:[%s1 + $0x118] sm:$0xff]
    %v70 = vld [vmem:[%s1 + $0x120] sm:$0xff]
    %v71 = vld [vmem:[%s1 + $0x128] sm:$0xff]
    %v72 = vld [vmem:[%s1 + $0x130] sm:$0xff]
    %v73 = vld [vmem:[%s1 + $0x138] sm:$0xff]
    %v74 = vld [vmem:[%s1 + $0x140] sm:$0xff]
    %v75 = vld [vmem:[%s1 + $0x148] sm:$0xff]
    %v76 = vld [vmem:[%s1 + $0x150] sm:$0xff]
    %v77 = vld [vmem:[%s1 + $0x158] sm:$0xff]
    %v78 = vld [vmem:[%s1 + $0x160] sm:$0xff]
    %v79 = vld [vmem:[%s1 + $0x168] sm:$0xff]
    %v80 = vld [vmem:[%s1 + $0x170] sm:$0xff]
    %v81 = vld [vmem:[%s1 + $0x178] sm:$0xff]
    %v82 = vld [vmem:[%s1 + $0x180] sm:$0xff]
    %v83 = vld [vmem:[%s1 + $0x188] sm:$0xff]
    %v84 = vld [vmem:[%s1 + $0x190] sm:$0xff]
    %v85 = vld [vmem:[%s1 + $0x198] sm:$0xff]
    %v86 = vld [vmem:[%s1 + $0x1a0] sm:$0xff]
    %v87 = vld [vmem:[%s1 + $0x1a8] sm:$0xff]
    %v88 = vld [vmem:[%s1 + $0x1b0] sm:$0xff]
    %v89 = vld [vmem:[%s1 + $0x1b8] sm:$0xff]
    %v90 = vld [vmem:[%s1 + $0x1c0] sm:$0xff]
    %v91 = vld [vmem:[%s1 + $0x1c8] sm:$0xff]
    %v92 = vld [vmem:[%s1 + $0x1d0] sm:$0xff]
    %v93 = vld [vmem:[%s1 + $0x1d8] sm:$0xff]
    %v94 = vld [vmem:[%s1 + $0x1e0] sm:$0xff]
    %v95 = vld [vmem:[%s1 + $0x1e8] sm:$0xff]
    %v96 = vld [vmem:[%s1 + $0x1f0] sm:$0xff]
    %v97 = vld [vmem:[%s1 + $0x1f8] sm:$0xff]
    %v98 = vld [vmem:[%s1 + $0x200] sm:$0xff]
    %v99 = vld [vmem:[%s1 + $0x208] sm:$0xff]
    %v100 = vld [vmem:[%s1 + $0x210] sm:$0xff]
    %v101 = vld [vmem:[%s1 + $0x218] sm:$0xff]
    %v102 = vld [vmem:[%s1 + $0x220] sm:$0xff]
    %v103 = vld [vmem:[%s1 + $0x228] sm:$0xff]
    %v104 = vld [vmem:[%s1 + $0x230] sm:$0xff]
    %v105 = vld [vmem:[%s1 + $0x238] sm:$0xff]
    %v106 = vld [vmem:[%s1 + $0x240] sm:$0xff]
    %v107 = vld [vmem:[%s1 + $0x248] sm:$0xff]
    %v108 = vld [vmem:[%s1 + $0x250] sm:$0xff]
    %v109 = vld [vmem:[%s1 + $0x258] sm:$0xff]
    %v110 = vld [vmem:[%s1 + $0x260] sm:$0xff]
    %v111 = vld [vmem:[%s1 + $0x268] sm:$0xff]
    %v112 = vld [vmem:[%s1 + $0x270] sm:$0xff]
    %v113 = vld [vmem:[%s1 + $0x278] sm:$0xff]
    %114 = vmatpush.msra.mxu0 %v49
    %115 = vmatpush.msra.mxu0 %v48
    %116 = vmatpush.msra.mxu0 %v47
    %117 = vmatpush.msra.mxu0 %v46
    %118 = vmatpush.msra.mxu0 %v45
    %119 = vmatpush.msra.mxu0 %v44
    %120 = vmatpush.msra.mxu0 %v43
    %121 = vmatpush.msra.mxu0 %v42
    %122 = vmatpush.msra.mxu0 %v41
    %123 = vmatpush.msra.mxu0 %v40
    %124 = vmatpush.msra.mxu0 %v39
    %125 = vmatpush.msra.mxu0 %v38
    %126 = vmatpush.msra.mxu0 %v37
    %127 = vmatpush.msra.mxu0 %v36
    %128 = vmatpush.msra.mxu0 %v35
    %129 = vmatpush.msra.mxu0 %v34
    %130 = vmatmul.f32.gmra.mxu0 %v14
    %v131 = vpop.f32.mrf.mxu0
    %v132 = vadd.f32 0.0, %v131
    %133 = vmatmul.f32.gmra.mxu0 %v19
    %v134 = vpop.f32.mrf.mxu0
    %v135 = vadd.f32 0.0, %v134
    %136 = vmatmul.f32.gmra.mxu0 %v24
    %v137 = vpop.f32.mrf.mxu0
    %v138 = vadd.f32 0.0, %v137
    %139 = vmatmul.f32.gmra.mxu0 %v29
    %v140 = vpop.f32.mrf.mxu0
    %v141 = vadd.f32 0.0, %v140
    %142 = vdwg.mxu0
    %143 = vmatpush.msra.mxu0 %v65
    %144 = vmatpush.msra.mxu0 %v64
    %145 = vmatpush.msra.mxu0 %v63
    %146 = vmatpush.msra.mxu0 %v62
    %147 = vmatpush.msra.mxu0 %v61
    %148 = vmatpush.msra.mxu0 %v60
    %149 = vmatpush.msra.mxu0 %v59
    %150 = vmatpush.msra.mxu0 %v58
    %151 = vmatpush.msra.mxu0 %v57
    %152 = vmatpush.msra.mxu0 %v56
    %153 = vmatpush.msra.mxu0 %v55
    %154 = vmatpush.msra.mxu0 %v54
    %155 = vmatpush.msra.mxu0 %v53
    %156 = vmatpush.msra.mxu0 %v52
    %157 = vmatpush.msra.mxu0 %v51
    %158 = vmatpush.msra.mxu0 %v50
    %159 = vmatmul.f32.gmra.mxu0 %v15
    %v160 = vpop.f32.mrf.mxu0
    %v161 = vadd.f32 %v132, %v160
    %162 = vmatmul.f32.gmra.mxu0 %v20
    %v163 = vpop.f32.mrf.mxu0
    %v164 = vadd.f32 %v135, %v163
    %165 = vmatmul.f32.gmra.mxu0 %v25
    %v166 = vpop.f32.mrf.mxu0
    %v167 = vadd.f32 %v138, %v166
    %168 = vmatmul.f32.gmra.mxu0 %v30
    %v169 = vpop.f32.mrf.mxu0
    %v170 = vadd.f32 %v141, %v169
    %171 = vdwg.mxu0
    %172 = vmatpush.msra.mxu0 %v81
    %173 = vmatpush.msra.mxu0 %v80
    %174 = vmatpush.msra.mxu0 %v79
    %175 = vmatpush.msra.mxu0 %v78
    %176 = vmatpush.msra.mxu0 %v77
    %177 = vmatpush.msra.mxu0 %v76
    %178 = vmatpush.msra.mxu0 %v75
    %179 = vmatpush.msra.mxu0 %v74
    %180 = vmatpush.msra.mxu0 %v73
    %181 = vmatpush.msra.mxu0 %v72
    %182 = vmatpush.msra.mxu0 %v71
    %183 = vmatpush.msra.mxu0 %v70
    %184 = vmatpush.msra.mxu0 %v69
    %185 = vmatpush.msra.mxu0 %v68
    %186 = vmatpush.msra.mxu0 %v67
    %187 = vmatpush.msra.mxu0 %v66
    %188 = vmatmul.f32.gmra.mxu0 %v16
    %v189 = vpop.f32.mrf.mxu0
    %v190 = vadd.f32 %v161, %v189
    %191 = vmatmul.f32.gmra.mxu0 %v21
    %v192 = vpop.f32.mrf.mxu0
    %v193 = vadd.f32 %v164, %v192
    %194 = vmatmul.f32.gmra.mxu0 %v26
    %v195 = vpop.f32.mrf.mxu0
    %v196 = vadd.f32 %v167, %v195
    %197 = vmatmul.f32.gmra.mxu0 %v31
    %v198 = vpop.f32.mrf.mxu0
    %v199 = vadd.f32 %v170, %v198
    %200 = vdwg.mxu0
    %201 = vmatpush.msra.mxu0 %v97
    %202 = vmatpush.msra.mxu0 %v96
    %203 = vmatpush.msra.mxu0 %v95
    %204 = vmatpush.msra.mxu0 %v94
    %205 = vmatpush.msra.mxu0 %v93
    %206 = vmatpush.msra.mxu0 %v92
    %207 = vmatpush.msra.mxu0 %v91
    %208 = vmatpush.msra.mxu0 %v90
    %209 = vmatpush.msra.mxu0 %v89
    %210 = vmatpush.msra.mxu0 %v88
    %211 = vmatpush.msra.mxu0 %v87
    %212 = vmatpush.msra.mxu0 %v86
    %213 = vmatpush.msra.mxu0 %v85
    %214 = vmatpush.msra.mxu0 %v84
    %215 = vmatpush.msra.mxu0 %v83
    %216 = vmatpush.msra.mxu0 %v82
    %217 = vmatmul.f32.gmra.mxu0 %v17
    %v218 = vpop.f32.mrf.mxu0
    %v219 = vadd.f32 %v190, %v218
    %220 = vmatmul.f32.gmra.mxu0 %v22
    %v221 = vpop.f32.mrf.mxu0
    %v222 = vadd.f32 %v193, %v221
    %223 = vmatmul.f32.gmra.mxu0 %v27
    %v224 = vpop.f32.mrf.mxu0
    %v225 = vadd.f32 %v196, %v224
    %226 = vmatmul.f32.gmra.mxu0 %v32
    %v227 = vpop.f32.mrf.mxu0
    %v228 = vadd.f32 %v199, %v227
    %229 = vdwg.mxu0
    %230 = vmatpush.msra.mxu0 %v113
    %231 = vmatpush.msra.mxu0 %v112
    %232 = vmatpush.msra.mxu0 %v111
    %233 = vmatpush.msra.mxu0 %v110
    %234 = vmatpush.msra.mxu0 %v109
    %235 = vmatpush.msra.mxu0 %v108
    %236 = vmatpush.msra.mxu0 %v107
    %237 = vmatpush.msra.mxu0 %v106
    %238 = vmatpush.msra.mxu0 %v105
    %239 = vmatpush.msra.mxu0 %v104
    %240 = vmatpush.msra.mxu0 %v103
    %241 = vmatpush.msra.mxu0 %v102
    %242 = vmatpush.msra.mxu0 %v101
    %243 = vmatpush.msra.mxu0 %v100
    %244 = vmatpush.msra.mxu0 %v99
    %245 = vmatpush.msra.mxu0 %v98
    %246 = vmatmul.f32.gmra.mxu0 %v18
    %v247 = vpop.f32.mrf.mxu0
    %v248 = vadd.f32 %v219, %v247
    %249 = vmatmul.f32.gmra.mxu0 %v23
    %v250 = vpop.f32.mrf.mxu0
    %v251 = vadd.f32 %v222, %v250
    %252 = vmatmul.f32.gmra.mxu0 %v28
    %v253 = vpop.f32.mrf.mxu0
    %v254 = vadd.f32 %v225, %v253
    %255 = vmatmul.f32.gmra.mxu0 %v33
    %v256 = vpop.f32.mrf.mxu0
    %v257 = vadd.f32 %v228, %v256
    %258 = vdwg.mxu0
    %v259 = vxor.u32 %v248, 2147483648
    %v260 = vxor.u32 %v251, 2147483648
    %v261 = vxor.u32 %v254, 2147483648
    %v262 = vxor.u32 %v257, 2147483648
    %v263 = vmul.f32 %v259, 1.442695
    %v264 = vpow.pop %v263
    %v265 = vmul.f32 %v260, 1.442695
    %v266 = vpow.pop %v265
    %v267 = vmul.f32 %v261, 1.442695
    %v268 = vpow.pop %v267
    %v269 = vmul.f32 %v262, 1.442695
    %v270 = vpow.pop %v269
    %v271 = vadd.f32 %v264, 1.0
    %v272 = vadd.f32 %v266, 1.0
    %v273 = vadd.f32 %v268, 1.0
    %v274 = vadd.f32 %v270, 1.0
    %v275 = vrcp.pop %v271
    %v276 = vmul.f32 %v271, %v275
    %v277 = vsub.f32 1.0, %v276
    %v278 = vmul.f32 %v275, %v277
    %v279 = vadd.f32 %v275, %v278
    %vm280 = vweird.f32 %v271
    %vm281 = vweird.f32 %v275
    %vm282 = vmor %vm280, %vm281
    %v283 = vsel %vm282, %v275, %v279
    %v284 = vand.u32 2147483647, %v271
    %vm285 = vcmp.eq.f32.partialorder %v284, 8.507059e+37
    %v286 = vand.u32 %v271, 2147483648
    %v287 = vor.u32 1.1754944e-38, %v286
    %v288 = vsel %vm285, %v287, %v283
    %v289 = vmul.f32 1.0, %v288
    %v290 = vrcp.pop %v272
    %v291 = vmul.f32 %v272, %v290
    %v292 = vsub.f32 1.0, %v291
    %v293 = vmul.f32 %v290, %v292
    %v294 = vadd.f32 %v290, %v293
    %vm295 = vweird.f32 %v272
    %vm296 = vweird.f32 %v290
    %vm297 = vmor %vm295, %vm296
    %v298 = vsel %vm297, %v290, %v294
    %v299 = vand.u32 2147483647, %v272
    %vm300 = vcmp.eq.f32.partialorder %v299, 8.507059e+37
    %v301 = vand.u32 %v272, 2147483648
    %v302 = vor.u32 1.1754944e-38, %v301
    %v303 = vsel %vm300, %v302, %v298
    %v304 = vmul.f32 1.0, %v303
    %v305 = vrcp.pop %v273
    %v306 = vmul.f32 %v273, %v305
    %v307 = vsub.f32 1.0, %v306
    %v308 = vmul.f32 %v305, %v307
    %v309 = vadd.f32 %v305, %v308
    %vm310 = vweird.f32 %v273
    %vm311 = vweird.f32 %v305
    %vm312 = vmor %vm310, %vm311
    %v313 = vsel %vm312, %v305, %v309
    %v314 = vand.u32 2147483647, %v273
    %vm315 = vcmp.eq.f32.partialorder %v314, 8.507059e+37
    %v316 = vand.u32 %v273, 2147483648
    %v317 = vor.u32 1.1754944e-38, %v316
    %v318 = vsel %vm315, %v317, %v313
    %v319 = vmul.f32 1.0, %v318
    %v320 = vrcp.pop %v274
    %v321 = vmul.f32 %v274, %v320
    %v322 = vsub.f32 1.0, %v321
    %v323 = vmul.f32 %v320, %v322
    %v324 = vadd.f32 %v320, %v323
    %vm325 = vweird.f32 %v274
    %vm326 = vweird.f32 %v320
    %vm327 = vmor %vm325, %vm326
    %v328 = vsel %vm327, %v320, %v324
    %v329 = vand.u32 2147483647, %v274
    %vm330 = vcmp.eq.f32.partialorder %v329, 8.507059e+37
    %v331 = vand.u32 %v274, 2147483648
    %v332 = vor.u32 1.1754944e-38, %v331
    %v333 = vsel %vm330, %v332, %v328
    %v334 = vmul.f32 1.0, %v333
    %335 = vst [vmem:[%s2] sm:$0xff] %v289
    %336 = vst [vmem:[%s2 + $0x8] sm:$0xff] %v304
    %337 = vst [vmem:[%s2 + $0x10] sm:$0xff] %v319
    %338 = vst [vmem:[%s2 + $0x18] sm:$0xff] %v334
    %v339 = vmul.f32 %v289, %v289
    %v340 = vmul.f32 %v304, %v304
    %v341 = vmul.f32 %v319, %v319
    %v342 = vmul.f32 %v334, %v334
    %v343 = vadd.f32 %v339, %v340
    %v344 = vadd.f32 %v343, %v341
    %v345 = vadd.f32 %v344, %v342
    %346 = vadd.xlane.f32.xlu0 %v345
    %v347 = vpop.xlane.xlu0 %346
    %v348 = vrot.slane %v347, 4
    %v349 = vadd.f32 %v347, %v348
    %v350 = vrot.slane %v349, 2
    %v351 = vadd.f32 %v349, %v350
    %v352 = vrot.slane %v351, 1
    %v353 = vadd.f32 %v351, %v352
    %s354 = vtos %v353
    %s355 = smul.f32 %s354, 0.01
    %v356 = vstv %s355
    %vm357 = vcmask 0
    %358 = vst.msk [vmem:[#allocation2] sm:$0x1] %vm357, %v356
    // Predicated region
    $region10: #{_forward.1} parent=1 // pred_check
      _
    $region11: #{_forward.1} parent=1 // pred_check_branch
      %360 = sbr.rel (0) target = $region13
    $region12: #{_forward.1} parent=1 // pred_region
      _
    $region13: #{_forward.1} parent=1 // pred_fallthru
      _
    // Predicated region
    $region14: #{_forward.1} parent=1 // pred_check
      _
    $region15: #{_forward.1} parent=1 // pred_check_branch
      %362 = sbr.rel (0) target = $region17
    $region16: #{_forward.1} parent=1 // pred_region
      %364 = vsyncadd [#allocation3], 0
      %s366 = sshll.u32 [#allocation2], 4
      %s367 = int_to_ptr.vmem [resolvable:$true] %s366
      %s368 = sshll.u32 %s3, 4
      %s369 = int_to_ptr.hbm [resolvable:$true] %s368
      %371 = dma.vmem_to_hbm [thread:$0]  %s367, 16, %s369, [#allocation3]
    $region17: #{_forward.1} parent=1 // pred_fallthru
      _
    // Predicated region
    $region18: #{_forward.1} parent=1 // pred_check
      _
    $region19: #{_forward.1} parent=1 // pred_check_branch
      %373 = sbr.rel (0) target = $region21
    $region20: #{_forward.1} parent=1 // pred_region
      _
    $region21: #{_forward.1} parent=1 // pred_fallthru
      _
    // Predicated region
    $region22: #{_forward.1} parent=1 // pred_check
      _
    $region23: #{_forward.1} parent=1 // pred_check_branch
      %375 = sbr.rel (0) target = $region25
    $region24: #{_forward.1} parent=1 // pred_region
      %377 = dma.done [#allocation3], 16
    $region25: #{_forward.1} parent=1 // pred_fallthru
      _
    %378 = vsyncpa [#allocation3], 1

</llo_original>
